<compile_context>
chip_gen: v5e
topology: v5e:2x2
jax: 0.10.0
libtpu: 0.0.40
codegen_flags: <defaults>
</compile_context>

<pallas_src>
import functools
import math

import jax
import jax.numpy as jnp
import numpy as np
from jax.experimental import pallas as pl
from jax.experimental.pallas import tpu as pltpu


def _round_up(a: int, b: int) -> int:
    return (a + b - 1) // b * b


# ----------------------------------------------------------------------------
# Shared LN + GELU + linear_out epilogue (h is f32, padded cols of h are 0).
# ----------------------------------------------------------------------------
def _ln_gelu_linear_out(h, gamma_ref, beta_ref, w_out_ref, b_out_ref, o_ref,
                        *, d_valid: int, use_tanh_gelu: bool):
    d_pad = h.shape[-1]
    inv_d = jnp.float32(1.0 / d_valid)
    mean = jnp.sum(h, axis=-1, keepdims=True) * inv_d
    if d_valid == d_pad:
        diff = h - mean
        var = jnp.sum(diff * diff, axis=-1, keepdims=True) * inv_d
        hn = diff * jax.lax.rsqrt(var + jnp.float32(1e-5))
    else:
        # Padded h columns are exactly zero, so full-width sums are the valid-
        # column sums; no broadcasted_iota / mask multiplies needed.
        ex2 = jnp.sum(h * h, axis=-1, keepdims=True) * inv_d
        var = jnp.maximum(ex2 - mean * mean, jnp.float32(0.0))
        hn = (h - mean) * jax.lax.rsqrt(var + jnp.float32(1e-5))
    # gamma/beta are zero in padded columns -> hn (and gelu(hn)) padded cols = 0.
    hn = hn * gamma_ref[...].astype(jnp.float32) + beta_ref[...].astype(jnp.float32)

    if use_tanh_gelu:
        # tanh form routes through the EUP slot (perf); erf is the torch default.
        c = math.sqrt(2.0 / math.pi)
        ge = 0.5 * hn * (1.0 + jnp.tanh(c * (hn + 0.044715 * hn * hn * hn)))
    else:
        ge = 0.5 * hn * (1.0 + jax.lax.erf(hn * (1.0 / math.sqrt(2.0))))

    out = jnp.dot(ge.astype(w_out_ref.dtype), w_out_ref[...],
                  preferred_element_type=jnp.float32)
    out = out + b_out_ref[...].astype(jnp.float32)
    o_ref[...] = out.astype(o_ref.dtype)


# ----------------------------------------------------------------------------
# Fully fused path: both weight matrices resident in VMEM, one grid axis (rows)
# ----------------------------------------------------------------------------
def _fused_kernel(x_ref, w_in_ref, b_in_ref, gamma_ref, beta_ref,
                  w_out_ref, b_out_ref, o_ref, *, d_valid: int,
                  use_tanh_gelu: bool):
    h = jnp.dot(x_ref[...], w_in_ref[...], preferred_element_type=jnp.float32)
    h = h + b_in_ref[...].astype(jnp.float32)
    _ln_gelu_linear_out(h, gamma_ref, beta_ref, w_out_ref, b_out_ref, o_ref,
                        d_valid=d_valid, use_tanh_gelu=use_tanh_gelu)


# ----------------------------------------------------------------------------
# K-tiled path: W_in streamed in (tk, d_in_p) slabs, f32 accumulator scratch.
# ----------------------------------------------------------------------------
def _ktiled_kernel(x_ref, w_in_ref, b_in_ref, gamma_ref, beta_ref,
                   w_out_ref, b_out_ref, o_ref, acc_ref, *, d_valid: int,
                   use_tanh_gelu: bool):
    k = pl.program_id(1)

    @pl.when(k == 0)
    def _():
        acc_ref[...] = jnp.zeros_like(acc_ref)

    acc_ref[...] += jnp.dot(x_ref[...], w_in_ref[...],
                            preferred_element_type=jnp.float32)

    @pl.when(k == pl.num_programs(1) - 1)
    def _():
        h = acc_ref[...] + b_in_ref[...].astype(jnp.float32)
        _ln_gelu_linear_out(h, gamma_ref, beta_ref, w_out_ref, b_out_ref,
                            o_ref, d_valid=d_valid, use_tanh_gelu=use_tanh_gelu)


# ----------------------------------------------------------------------------
# Wrapper
# ----------------------------------------------------------------------------
def regression_head(x, params, *, row_tile=None, k_tile=None,
                    use_tanh_gelu=False, force_k_tiling=False):
    """x: (..., D) float array. params: dict of kernel-layout parameters."""
    w_in, b_in, gamma, beta, w_out, b_out = (
        params["w_in"], params["b_in"], params["gamma"],
        params["beta"], params["w_out"], params["b_out"])
    d_in = w_in.shape[0]
    d_out = w_out.shape[1]
    param_dtype = w_in.dtype
    itemsize = np.dtype(param_dtype).itemsize

    lead = x.shape[:-1]
    x2 = x.reshape(-1, d_in).astype(param_dtype)
    n = x2.shape[0]

    d_in_p = _round_up(d_in, 128)     # lane-dense LN width / 2nd-matmul K
    d_out_p = _round_up(d_out, 128)   # lane-dense output slab

    # dtype-aware sublane multiple (8 f32 / 16 bf16 / 32 int8)
    sub = 8 * max(1, 4 // itemsize)

    # ---- generation-aware VMEM budget (v5e/v6e: 128 MiB, v7x: 64 MiB) ------
    try:
        vmem_cap = int(pltpu.get_tpu_info().vmem_capacity_bytes)
    except Exception:  # pragma: no cover - conservative (v7x-sized) fallback
        vmem_cap = 64 * 1024 * 1024
    vmem_budget = max(32 * 1024 * 1024, vmem_cap - 24 * 1024 * 1024)
    vmem_cap_limit = max(40 * 1024 * 1024, vmem_cap - 8 * 1024 * 1024)

    # ---- row-tile selection: large tiles amortize the ~0.35us/step overhead.
    if row_tile is None:
        row_tile = 1024 if itemsize < 4 else 512
    row_tile = max(sub, _round_up(int(row_tile), sub))
    row_tile = min(row_tile, _round_up(max(n, 1), sub))   # don't blow up tiny n
    if n > sub:                                           # >=2 steps (2 TCs on v7x)
        row_tile = min(row_tile, _round_up(-(-n // 2), sub))
    row_tile = max(sub, row_tile)

    # Resident (single-buffered) weight footprint of the fused path.
    weight_bytes = ((_round_up(d_in, 8) * d_in_p + d_in_p * d_out_p) * itemsize
                    + 8 * (3 * d_in_p + d_out_p) * itemsize)

    def act_bytes(rt):
        # double-buffered x / out tiles + f32 elementwise temporaries
        return 2 * rt * (d_in_p + d_out_p) * itemsize + 5 * rt * d_in_p * 4

    use_k_tiling = force_k_tiling or (
        weight_bytes + act_bytes(min(row_tile, 256)) > vmem_budget)

    single = dict(pipeline_mode=pl.Buffered(1))   # loop-invariant param blocks

    def pad_to(a, shape):
        if tuple(a.shape) == tuple(shape):
            return a
        return jnp.pad(a, [(0, t - s) for s, t in zip(a.shape, shape)])

    # Zero-padded parameters: padded lanes stay exactly zero end-to-end.
    b_in_p = pad_to(b_in, (1, d_in_p))
    gamma_p = pad_to(gamma, (1, d_in_p))
    beta_p = pad_to(beta, (1, d_in_p))
    w_out_p = pad_to(w_out, (d_in_p, d_out_p))
    b_out_p = pad_to(b_out, (1, d_out_p))

    if not use_k_tiling:
        # ------------------ fully fused path --------------------------------
        while row_tile > sub and weight_bytes + act_bytes(row_tile) > vmem_budget:
            row_tile = max(sub, _round_up(row_tile // 2, sub))
        grid = (pl.cdiv(n, row_tile),)

        w_in_p = pad_to(w_in, (d_in, d_in_p))   # pad output features only

        est = weight_bytes + act_bytes(row_tile)
        vmem_limit = int(min(vmem_cap_limit, max(32 * 1024 * 1024, 2 * est)))

        flops = 2 * n * d_in * d_in_p + 2 * n * d_in_p * d_out_p
        bytes_accessed = int((n * d_in + n * d_out_p) * itemsize
                             + (w_in_p.size + w_out_p.size) * itemsize)

        kernel = functools.partial(_fused_kernel, d_valid=d_in,
                                   use_tanh_gelu=use_tanh_gelu)
        out_p = pl.pallas_call(
            kernel,
            out_shape=jax.ShapeDtypeStruct((n, d_out_p), param_dtype),
            grid_spec=pltpu.PrefetchScalarGridSpec(
                num_scalar_prefetch=0,
                grid=grid,
                in_specs=[
                    pl.BlockSpec((row_tile, d_in),  lambda i: (i, 0)),            # x (unpadded)
                    pl.BlockSpec((d_in, d_in_p),    lambda i: (0, 0), **single),  # W_in
                    pl.BlockSpec((1, d_in_p),       lambda i: (0, 0), **single),  # b_in
                    pl.BlockSpec((1, d_in_p),       lambda i: (0, 0), **single),  # gamma
                    pl.BlockSpec((1, d_in_p),       lambda i: (0, 0), **single),  # beta
                    pl.BlockSpec((d_in_p, d_out_p), lambda i: (0, 0), **single),  # W_out
                    pl.BlockSpec((1, d_out_p),      lambda i: (0, 0), **single),  # b_out
                ],
                out_specs=pl.BlockSpec((row_tile, d_out_p), lambda i: (i, 0)),
            ),
            compiler_params=pltpu.CompilerParams(
                dimension_semantics=("parallel",),
                vmem_limit_bytes=vmem_limit),
            cost_estimate=pl.CostEstimate(flops=int(flops),
                                          transcendentals=int(n * d_in_p),
                                          bytes_accessed=bytes_accessed),
        )(x2, w_in_p, b_in_p, gamma_p, beta_p, w_out_p, b_out_p)
    else:
        # ------------------ K-tiled path (large d_in) ------------------------
        if k_tile is None:
            k_tile = 512
        tk = max(128, _round_up(int(k_tile), 128))
        tk = min(tk, _round_up(d_in, 128))

        rt = max(sub, _round_up(min(row_tile, 256), sub))

        def k_bytes(rt_, tk_):
            return ((2 * tk_ * d_in_p + d_in_p * d_out_p
                     + 8 * (3 * d_in_p + d_out_p)) * itemsize
                    + 2 * rt_ * (tk_ + d_out_p) * itemsize
                    + 5 * rt_ * d_in_p * 4)       # acc scratch + f32 temporaries

        while rt > sub and k_bytes(rt, tk) > vmem_budget:
            rt = max(sub, _round_up(rt // 2, sub))
        while tk > 128 and k_bytes(rt, tk) > vmem_budget:
            tk = max(128, tk // 2)

        d_in_kp = _round_up(d_in, tk)
        x_k = pad_to(x2, (n, d_in_kp))            # zero-pad K so partial K slabs never appear
        w_in_p = pad_to(w_in, (d_in_kp, d_in_p))

        grid = (pl.cdiv(n, rt), d_in_kp // tk)

        est = k_bytes(rt, tk)
        vmem_limit = int(min(vmem_cap_limit, max(32 * 1024 * 1024, 2 * est)))

        flops = 2 * n * d_in_kp * d_in_p + 2 * n * d_in_p * d_out_p
        bytes_accessed = int((n * d_in_kp + n * d_out_p) * itemsize
                             + (grid[0] * w_in_p.size + w_out_p.size) * itemsize)

        kernel = functools.partial(_ktiled_kernel, d_valid=d_in,
                                   use_tanh_gelu=use_tanh_gelu)
        out_p = pl.pallas_call(
            kernel,
            out_shape=jax.ShapeDtypeStruct((n, d_out_p), param_dtype),
            grid_spec=pltpu.PrefetchScalarGridSpec(
                num_scalar_prefetch=0,
                grid=grid,
                in_specs=[
                    pl.BlockSpec((rt, tk),          lambda i, k: (i, k)),            # x
                    pl.BlockSpec((tk, d_in_p),      lambda i, k: (k, 0)),            # W_in slab
                    pl.BlockSpec((1, d_in_p),       lambda i, k: (0, 0), **single),  # b_in
                    pl.BlockSpec((1, d_in_p),       lambda i, k: (0, 0), **single),  # gamma
                    pl.BlockSpec((1, d_in_p),       lambda i, k: (0, 0), **single),  # beta
                    pl.BlockSpec((d_in_p, d_out_p), lambda i, k: (0, 0), **single),  # W_out
                    pl.BlockSpec((1, d_out_p),      lambda i, k: (0, 0), **single),  # b_out
                ],
                out_specs=pl.BlockSpec((rt, d_out_p), lambda i, k: (i, 0)),
                scratch_shapes=[pltpu.VMEM((rt, d_in_p), jnp.float32)],
            ),
            compiler_params=pltpu.CompilerParams(
                dimension_semantics=("parallel", "arbitrary"),
                vmem_limit_bytes=vmem_limit),
            cost_estimate=pl.CostEstimate(flops=int(flops),
                                          transcendentals=int(n * d_in_p),
                                          bytes_accessed=bytes_accessed),
        )(x_k, w_in_p, b_in_p, gamma_p, beta_p, w_out_p, b_out_p)

    out = out_p if d_out == d_out_p else out_p[:, :d_out]
    return out.reshape(*lead, d_out)


# ----------------------------------------------------------------------------
# Synthetic parameters + pure-JAX reference
# ----------------------------------------------------------------------------
def init_params(key, input_dim, output_dim, dtype=jnp.float32):
    # Deterministic synthetic init mirroring the module's structure.
    # (True init: linear_in trunc_normal scale=2/fan_in, bias=0; LN gamma=1,
    # beta=0; linear_out 'final' -> weight=0, bias=0. Small random values are
    # used instead of exact zeros so the full datapath is exercised.)
    k1, k2, k3, k4, k5 = jax.random.split(key, 5)
    std_in = math.sqrt(2.0 / input_dim) / 0.8796256610342398
    w_in = (std_in * jax.random.normal(k1, (input_dim, input_dim))).astype(dtype)
    b_in = (0.01 * jax.random.normal(k2, (1, input_dim))).astype(dtype)
    gamma = jnp.ones((1, input_dim), dtype)
    beta = (0.01 * jax.random.normal(k5, (1, input_dim))).astype(dtype)
    w_out = (0.02 * jax.random.normal(k3, (input_dim, output_dim))).astype(dtype)
    b_out = (0.01 * jax.random.normal(k4, (1, output_dim))).astype(dtype)
    return dict(w_in=w_in, b_in=b_in, gamma=gamma, beta=beta,
                w_out=w_out, b_out=b_out)


def regression_head_reference(x, params):
    """Pure-JAX reference mirroring the PyTorch forward."""
    w_in, b_in = params["w_in"], params["b_in"]
    gamma, beta = params["gamma"], params["beta"]
    w_out, b_out = params["w_out"], params["b_out"]
    x = x.astype(w_in.dtype)
    h = x @ w_in + b_in
    mean = jnp.mean(h, axis=-1, keepdims=True)
    var = jnp.mean((h - mean) ** 2, axis=-1, keepdims=True)
    hn = (h - mean) / jnp.sqrt(var + 1e-5) * gamma + beta
    ge = 0.5 * hn * (1.0 + jax.lax.erf(hn / math.sqrt(2.0)))
    return ge @ w_out + b_out


if __name__ == "__main__":
    key = jax.random.PRNGKey(0)
    k_x, k_x2, k_x3, k_p, k_p2 = jax.random.split(key, 5)

    # ---- small module-spec shape (fused path, clamped row tile, 2 grid steps)
    batch, seq, input_dim, output_dim = 2, 8, 32, 8
    params = init_params(k_p, input_dim, output_dim)
    x = jax.random.normal(k_x, (batch, seq, input_dim), dtype=jnp.float32)
    out = jax.block_until_ready(regression_head(x, params))
    ref = regression_head_reference(x, params)
    np.testing.assert_allclose(np.asarray(out), np.asarray(ref),
                               rtol=1e-5, atol=2e-5)
    assert out.shape == (batch, seq, output_dim)

    # ---- larger, non-divisible N (partial last row tile, no wrapper pads) ---
    x_big = jax.random.normal(k_x2, (4, 100, input_dim), dtype=jnp.float32)
    out_big = jax.block_until_ready(regression_head(x_big, params))
    ref_big = regression_head_reference(x_big, params)
    np.testing.assert_allclose(np.asarray(out_big), np.asarray(ref_big),
                               rtol=1e-5, atol=2e-5)
    assert out_big.shape == (4, 100, output_dim)

    # ---- exercise the K-tiled path (forced at small scale) ------------------
    d2_in, d2_out = 256, 32
    params2 = init_params(k_p2, d2_in, d2_out)
    x_k = jax.random.normal(k_x3, (2, 40, d2_in), dtype=jnp.float32)
    out_k = jax.block_until_ready(
        regression_head(x_k, params2, force_k_tiling=True, k_tile=128))
    ref_k = regression_head_reference(x_k, params2)
    np.testing.assert_allclose(np.asarray(out_k), np.asarray(ref_k),
                               rtol=1e-5, atol=2e-5)
    assert out_k.shape == (2, 40, d2_out)

    print("KERNEL_OK")
</pallas_src>

<mosaic_0001>
module attributes {stable_mosaic.version = 11 : i64} {
  func.func @_fused_kernel(%arg0: i32, %arg1: memref<8x32xf32, #tpu.memory_space<vmem>>, %arg2: memref<32x128xf32, #tpu.memory_space<vmem>>, %arg3: memref<1x128xf32, #tpu.memory_space<vmem>>, %arg4: memref<1x128xf32, #tpu.memory_space<vmem>>, %arg5: memref<1x128xf32, #tpu.memory_space<vmem>>, %arg6: memref<128x128xf32, #tpu.memory_space<vmem>>, %arg7: memref<1x128xf32, #tpu.memory_space<vmem>>, %arg8: memref<8x128xf32, #tpu.memory_space<vmem>>) attributes {dimension_semantics = [#tpu.dimension_semantics<parallel>], iteration_bounds = array<i64: 2>, scalar_prefetch = 0 : i64, scratch_operands = 0 : i64, tpu.core_type = #tpu.core_type<tc>, window_params = [{transform_indices = @transform_0, window_bounds = array<i64: 8, 32>}, {pipeline_mode = #tpu.pipeline_mode<synchronous>, transform_indices = @transform_1, window_bounds = array<i64: 32, 128>}, {pipeline_mode = #tpu.pipeline_mode<synchronous>, transform_indices = @transform_2, window_bounds = array<i64: 1, 128>}, {pipeline_mode = #tpu.pipeline_mode<synchronous>, transform_indices = @transform_3, window_bounds = array<i64: 1, 128>}, {pipeline_mode = #tpu.pipeline_mode<synchronous>, transform_indices = @transform_4, window_bounds = array<i64: 1, 128>}, {pipeline_mode = #tpu.pipeline_mode<synchronous>, transform_indices = @transform_5, window_bounds = array<i64: 128, 128>}, {pipeline_mode = #tpu.pipeline_mode<synchronous>, transform_indices = @transform_6, window_bounds = array<i64: 1, 128>}, {transform_indices = @transform_7, window_bounds = array<i64: 8, 128>}]} {
    %c0 = arith.constant 0 : index
    %c0_0 = arith.constant 0 : index
    %0 = vector.load %arg1[%c0, %c0_0] : memref<8x32xf32, #tpu.memory_space<vmem>>, vector<8x32xf32>
    %c0_1 = arith.constant 0 : index
    %c0_2 = arith.constant 0 : index
    %1 = vector.load %arg2[%c0_1, %c0_2] : memref<32x128xf32, #tpu.memory_space<vmem>>, vector<32x128xf32>
    %cst = arith.constant dense<0.000000e+00> : vector<8x128xf32>
    %2 = tpu.matmul %0, %1, %cst {dimension_numbers = #tpu.dot_dimension_numbers<[1], [0], [0], [1], [0, 0, 1, 1], [], []>} : vector<8x32xf32>, vector<32x128xf32>, vector<8x128xf32> -> vector<8x128xf32>
    %c0_3 = arith.constant 0 : index
    %c0_4 = arith.constant 0 : index
    %3 = vector.load %arg3[%c0_3, %c0_4] : memref<1x128xf32, #tpu.memory_space<vmem>>, vector<1x128xf32>
    %4 = vector.broadcast %3 : vector<1x128xf32> to vector<8x128xf32>
    %5 = arith.addf %2, %4 : vector<8x128xf32>
    %cst_5 = arith.constant dense<0.000000e+00> : vector<8xf32>
    %6 = vector.multi_reduction <add>, %5, %cst_5 [1] : vector<8x128xf32> to vector<8xf32>
    %7 = vector.shape_cast %6 : vector<8xf32> to vector<8x1xf32>
    %cst_6 = arith.constant 3.125000e-02 : f32
    %8 = vector.broadcast %cst_6 : f32 to vector<8x1xf32>
    %9 = arith.mulf %7, %8 : vector<8x1xf32>
    %10 = arith.mulf %5, %5 : vector<8x128xf32>
    %cst_7 = arith.constant dense<0.000000e+00> : vector<8xf32>
    %11 = vector.multi_reduction <add>, %10, %cst_7 [1] : vector<8x128xf32> to vector<8xf32>
    %12 = vector.shape_cast %11 : vector<8xf32> to vector<8x1xf32>
    %cst_8 = arith.constant 3.125000e-02 : f32
    %13 = vector.broadcast %cst_8 : f32 to vector<8x1xf32>
    %14 = arith.mulf %12, %13 : vector<8x1xf32>
    %15 = arith.mulf %9, %9 : vector<8x1xf32>
    %16 = arith.subf %14, %15 : vector<8x1xf32>
    %cst_9 = arith.constant 0.000000e+00 : f32
    %17 = vector.broadcast %cst_9 : f32 to vector<8x1xf32>
    %18 = arith.maximumf %16, %17 : vector<8x1xf32>
    %19 = vector.broadcast %9 : vector<8x1xf32> to vector<8x128xf32>
    %20 = arith.subf %5, %19 : vector<8x128xf32>
    %cst_10 = arith.constant 9.99999974E-6 : f32
    %21 = vector.broadcast %cst_10 : f32 to vector<8x1xf32>
    %22 = arith.addf %18, %21 : vector<8x1xf32>
    %23 = math.rsqrt %22 : vector<8x1xf32>
    %24 = vector.broadcast %23 : vector<8x1xf32> to vector<8x128xf32>
    %25 = arith.mulf %20, %24 : vector<8x128xf32>
    %c0_11 = arith.constant 0 : index
    %c0_12 = arith.constant 0 : index
    %26 = vector.load %arg4[%c0_11, %c0_12] : memref<1x128xf32, #tpu.memory_space<vmem>>, vector<1x128xf32>
    %27 = vector.broadcast %26 : vector<1x128xf32> to vector<8x128xf32>
    %28 = arith.mulf %25, %27 : vector<8x128xf32>
    %c0_13 = arith.constant 0 : index
    %c0_14 = arith.constant 0 : index
    %29 = vector.load %arg5[%c0_13, %c0_14] : memref<1x128xf32, #tpu.memory_space<vmem>>, vector<1x128xf32>
    %30 = vector.broadcast %29 : vector<1x128xf32> to vector<8x128xf32>
    %31 = arith.addf %28, %30 : vector<8x128xf32>
    %cst_15 = arith.constant 5.000000e-01 : f32
    %32 = vector.broadcast %cst_15 : f32 to vector<8x128xf32>
    %33 = arith.mulf %32, %31 : vector<8x128xf32>
    %cst_16 = arith.constant 0.707106769 : f32
    %34 = vector.broadcast %cst_16 : f32 to vector<8x128xf32>
    %35 = arith.mulf %31, %34 : vector<8x128xf32>
    %36 = math.erf %35 : vector<8x128xf32>
    %cst_17 = arith.constant 1.000000e+00 : f32
    %37 = vector.broadcast %cst_17 : f32 to vector<8x128xf32>
    %38 = arith.addf %37, %36 : vector<8x128xf32>
    %39 = arith.mulf %33, %38 : vector<8x128xf32>
    %c0_18 = arith.constant 0 : index
    %c0_19 = arith.constant 0 : index
    %40 = vector.load %arg6[%c0_18, %c0_19] : memref<128x128xf32, #tpu.memory_space<vmem>>, vector<128x128xf32>
    %cst_20 = arith.constant dense<0.000000e+00> : vector<8x128xf32>
    %41 = tpu.matmul %39, %40, %cst_20 {dimension_numbers = #tpu.dot_dimension_numbers<[1], [0], [0], [1], [0, 0, 1, 1], [], []>} : vector<8x128xf32>, vector<128x128xf32>, vector<8x128xf32> -> vector<8x128xf32>
    %c0_21 = arith.constant 0 : index
    %c0_22 = arith.constant 0 : index
    %42 = vector.load %arg7[%c0_21, %c0_22] : memref<1x128xf32, #tpu.memory_space<vmem>>, vector<1x128xf32>
    %43 = vector.broadcast %42 : vector<1x128xf32> to vector<8x128xf32>
    %44 = arith.addf %41, %43 : vector<8x128xf32>
    %c0_23 = arith.constant 0 : index
    %c0_24 = arith.constant 0 : index
    %45 = vector.load %arg8[%c0_23, %c0_24] : memref<8x128xf32, #tpu.memory_space<vmem>>, vector<8x128xf32>
    tpu.vector_store %arg8[%c0_23, %c0_24], %44 {strides = array<i32>} : memref<8x128xf32, #tpu.memory_space<vmem>>, vector<8x128xf32>,
    return
  }
  func.func @transform_0(%arg0: i32) -> (i32, i32) {
    %c0_i32 = arith.constant 0 : i32
    %c0_i32_0 = arith.constant 0 : i32
    return %arg0, %c0_i32 : i32, i32
  }
  func.func @transform_1(%arg0: i32) -> (i32, i32) {
    %c0_i32 = arith.constant 0 : i32
    %c0_i32_0 = arith.constant 0 : i32
    %c0_i32_1 = arith.constant 0 : i32
    return %c0_i32, %c0_i32_0 : i32, i32
  }
  func.func @transform_2(%arg0: i32) -> (i32, i32) {
    %c0_i32 = arith.constant 0 : i32
    %c0_i32_0 = arith.constant 0 : i32
    %c0_i32_1 = arith.constant 0 : i32
    return %c0_i32, %c0_i32_0 : i32, i32
  }
  func.func @transform_3(%arg0: i32) -> (i32, i32) {
    %c0_i32 = arith.constant 0 : i32
    %c0_i32_0 = arith.constant 0 : i32
    %c0_i32_1 = arith.constant 0 : i32
    return %c0_i32, %c0_i32_0 : i32, i32
  }
  func.func @transform_4(%arg0: i32) -> (i32, i32) {
    %c0_i32 = arith.constant 0 : i32
    %c0_i32_0 = arith.constant 0 : i32
    %c0_i32_1 = arith.constant 0 : i32
    return %c0_i32, %c0_i32_0 : i32, i32
  }
  func.func @transform_5(%arg0: i32) -> (i32, i32) {
    %c0_i32 = arith.constant 0 : i32
    %c0_i32_0 = arith.constant 0 : i32
    %c0_i32_1 = arith.constant 0 : i32
    return %c0_i32, %c0_i32_0 : i32, i32
  }
  func.func @transform_6(%arg0: i32) -> (i32, i32) {
    %c0_i32 = arith.constant 0 : i32
    %c0_i32_0 = arith.constant 0 : i32
    %c0_i32_1 = arith.constant 0 : i32
    return %c0_i32, %c0_i32_0 : i32, i32
  }
  func.func @transform_7(%arg0: i32) -> (i32, i32) {
    %c0_i32 = arith.constant 0 : i32
    %c0_i32_0 = arith.constant 0 : i32
    return %arg0, %c0_i32 : i32, i32
  }
}

</mosaic_0001>

<llo_original>
// kernel: tpu_custom_call.1
$region0: #{tpu_custom_call.1}
  #allocation0 [shape = 'u32[]', space=smem, size = 0x4, offset = 0x4, fixed_abs, tag = 'smem constant byte address 0x4 - core index']
  #allocation1 [shape = 'u32[72,128]{1,0:T(1,128)}', space=vmem, size = 0x9000, scoped, tag = 'internal scratch']
  %s0 = inlined_call_operand.hbm [shape: f32[16,32], index: 0, kind: input, shape index: {}]
  %s1 = inlined_call_operand.hbm [shape: f32[32,128], index: 1, kind: input, shape index: {}]
  %s2 = inlined_call_operand.vmem [shape: f32[1,128], index: 2, kind: input, shape index: {}]
  %s3 = inlined_call_operand.vmem [shape: f32[1,128], index: 3, kind: input, shape index: {}]
  %s4 = inlined_call_operand.vmem [shape: f32[1,128], index: 4, kind: input, shape index: {}]
  %s5 = inlined_call_operand.hbm [shape: f32[128,128], index: 5, kind: input, shape index: {}]
  %s6 = inlined_call_operand.vmem [shape: f32[1,128], index: 6, kind: input, shape index: {}]
  %s7 = inlined_call_operand.hbm [shape: f32[16,128], index: 7, kind: output, shape index: {}]
  %s8 = sld [smem:[#allocation0]]
  $region73: #{tpu_custom_call.1} parent=0
    _
  %s10 = ssub.s32 1, %s8
  %s11 = scalar_select 0, %s10, %s8
  $region1: #{tpu_custom_call.1} parent=0
    #allocation2 [shape = 'u8[8192]{0}', space=vmem, size = 0x2000, scoped, tag = 'input window, operand 0']
    #allocation3 [shape = 's32[2]{0}', space=sflag, size = 0x8, scoped, tag = 'scoped memory for tpu_custom_call.1']
    #allocation4 [shape = 's32[2]{0}', space=sflag, size = 0x8, scoped, tag = 'scoped memory for tpu_custom_call.1']
    #allocation5 [shape = 'u8[16384]{0}', space=vmem, size = 0x4000, scoped, tag = 'input window, operand 1, single buffered']
    #allocation6 [shape = 's32[1]{0}', space=sflag, size = 0x4, scoped, tag = 'scoped memory for tpu_custom_call.1']
    #allocation7 [shape = 'u8[65536]{0}', space=vmem, size = 0x10000, scoped, tag = 'input window, operand 5, single buffered']
    #allocation8 [shape = 'u8[8192]{0}', space=vmem, size = 0x2000, scoped, tag = 'output window, operand 0']
    %12 = vsyncpa [#allocation3], 0
    %s13 = scalar_lea.sflag [#allocation3], 1
    %14 = vsyncpa %s13, 0
    %15 = vsyncpa [#allocation6], 0
    %16 = vsyncpa [#allocation4], 0
    %s17 = scalar_lea.sflag [#allocation4], 1
    %18 = vsyncpa %s17, 0
    loop: start=0, step=1, limit=4
    $region2: #{tpu_custom_call.1} parent=1 // loop_pre_header
      _
    $region3: #{tpu_custom_call.1} parent=1 // loop_header
      %s20 = sphi 0, %s24
      %p21 = scmp.ge.s32.totalorder %s20, 4
      %s30 = sphi 0, %s32
      %s33 = sphi 0, %s30
      %s34 = sphi 0, %s33
      %s50 = sphi 0, %s34
      %s54 = sphi 0, %s54
      %s56 = sphi 0, %s54
      %s57 = sphi 0, %s56
      %s71 = sphi 0, %s57
      %s75 = sphi 0, %s75
      %s77 = sphi 0, %s75
      %s78 = sphi 0, %s77
      %s92 = sphi 0, %s78
      %s96 = sphi 0, %s96
      %s98 = sphi 0, %s96
      %s99 = sphi 0, %s98
      %s113 = sphi 0, %s99
      %s117 = sphi 0, %s117
      %s119 = sphi 0, %s117
      %s120 = sphi 0, %s119
      %s134 = sphi 0, %s120
      %s138 = sphi 0, %s138
      %s140 = sphi 0, %s138
      %s141 = sphi 0, %s140
      %s155 = sphi 0, %s141
      %s159 = sphi 0, %s159
      %s161 = sphi 0, %s159
      %s162 = sphi 0, %s161
      %s176 = sphi 0, %s162
      %s182 = sphi 0, %s184
      %s185 = sphi 0, %s182
      %s186 = sphi 0, %s185
      %s202 = sphi 0, %s186
    $region4: #{tpu_custom_call.1} parent=1 // loop_header_branch
      %23 = sbr.rel (%p21) target = $region8
    $region5: #{tpu_custom_call.1} parent=1 // loop_body
      %s25 = ssub.s32 %s20, 1
      %s26 = ssub.s32 %s20, 2
      %s27 = sadd.s32 %s20, 1
      %s28 = ssub.s32 %s20, %s27
      %p29 = scmp.eq.s32.totalorder %s28, 0
      %s31 = sadd.s32 %s30, 1
      %s32 = scalar_select %p29, %s30, %s31
      %p35 = pneg %p29
      %p36 = scmp.eq.s32.totalorder %s20, 1
      %p37 = por %p35, %p36
      %p38 = scmp.ne.s32.totalorder %s30, %s33
      %p39 = scmp.eq.s32.totalorder %s20, 0
      %p40 = por %p38, %p39
      %p41 = scmp.ne.s32.totalorder %s30, %s33
      %p42 = scmp.eq.s32.totalorder %s25, 1
      %p43 = por %p41, %p42
      %p44 = scmp.ne.s32.totalorder %s33, %s34
      %p45 = scmp.eq.s32.totalorder %s25, 0
      %p46 = por %p44, %p45
      %p47 = scmp.ne.s32.totalorder %s33, %s34
      %p48 = scmp.eq.s32.totalorder %s26, 1
      %p49 = por %p47, %p48
      %p51 = scmp.ne.s32.totalorder %s34, %s50
      %p52 = scmp.eq.s32.totalorder %s26, 0
      %p53 = por %p51, %p52
      %s55 = sadd.s32 %s54, 1
      %p58 = scmp.eq.s32.totalorder %s20, 1
      %p59 = scmp.ne.s32.totalorder %s54, %s56
      %p60 = scmp.eq.s32.totalorder %s20, 0
      %p61 = por %p59, %p60
      %p62 = scmp.ne.s32.totalorder %s54, %s56
      %p63 = scmp.eq.s32.totalorder %s25, 1
      %p64 = por %p62, %p63
      %p65 = scmp.ne.s32.totalorder %s56, %s57
      %p66 = scmp.eq.s32.totalorder %s25, 0
      %p67 = por %p65, %p66
      %p68 = scmp.ne.s32.totalorder %s56, %s57
      %p69 = scmp.eq.s32.totalorder %s26, 1
      %p70 = por %p68, %p69
      %p72 = scmp.ne.s32.totalorder %s57, %s71
      %p73 = scmp.eq.s32.totalorder %s26, 0
      %p74 = por %p72, %p73
      %s76 = sadd.s32 %s75, 1
      %p79 = scmp.eq.s32.totalorder %s20, 1
      %p80 = scmp.ne.s32.totalorder %s75, %s77
      %p81 = scmp.eq.s32.totalorder %s20, 0
      %p82 = por %p80, %p81
      %p83 = scmp.ne.s32.totalorder %s75, %s77
      %p84 = scmp.eq.s32.totalorder %s25, 1
      %p85 = por %p83, %p84
      %p86 = scmp.ne.s32.totalorder %s77, %s78
      %p87 = scmp.eq.s32.totalorder %s25, 0
      %p88 = por %p86, %p87
      %p89 = scmp.ne.s32.totalorder %s77, %s78
      %p90 = scmp.eq.s32.totalorder %s26, 1
      %p91 = por %p89, %p90
      %p93 = scmp.ne.s32.totalorder %s78, %s92
      %p94 = scmp.eq.s32.totalorder %s26, 0
      %p95 = por %p93, %p94
      %s97 = sadd.s32 %s96, 1
      %p100 = scmp.eq.s32.totalorder %s20, 1
      %p101 = scmp.ne.s32.totalorder %s96, %s98
      %p102 = scmp.eq.s32.totalorder %s20, 0
      %p103 = por %p101, %p102
      %p104 = scmp.ne.s32.totalorder %s96, %s98
      %p105 = scmp.eq.s32.totalorder %s25, 1
      %p106 = por %p104, %p105
      %p107 = scmp.ne.s32.totalorder %s98, %s99
      %p108 = scmp.eq.s32.totalorder %s25, 0
      %p109 = por %p107, %p108
      %p110 = scmp.ne.s32.totalorder %s98, %s99
      %p111 = scmp.eq.s32.totalorder %s26, 1
      %p112 = por %p110, %p111
      %p114 = scmp.ne.s32.totalorder %s99, %s113
      %p115 = scmp.eq.s32.totalorder %s26, 0
      %p116 = por %p114, %p115
      %s118 = sadd.s32 %s117, 1
      %p121 = scmp.eq.s32.totalorder %s20, 1
      %p122 = scmp.ne.s32.totalorder %s117, %s119
      %p123 = scmp.eq.s32.totalorder %s20, 0
      %p124 = por %p122, %p123
      %p125 = scmp.ne.s32.totalorder %s117, %s119
      %p126 = scmp.eq.s32.totalorder %s25, 1
      %p127 = por %p125, %p126
      %p128 = scmp.ne.s32.totalorder %s119, %s120
      %p129 = scmp.eq.s32.totalorder %s25, 0
      %p130 = por %p128, %p129
      %p131 = scmp.ne.s32.totalorder %s119, %s120
      %p132 = scmp.eq.s32.totalorder %s26, 1
      %p133 = por %p131, %p132
      %p135 = scmp.ne.s32.totalorder %s120, %s134
      %p136 = scmp.eq.s32.totalorder %s26, 0
      %p137 = por %p135, %p136
      %s139 = sadd.s32 %s138, 1
      %p142 = scmp.eq.s32.totalorder %s20, 1
      %p143 = scmp.ne.s32.totalorder %s138, %s140
      %p144 = scmp.eq.s32.totalorder %s20, 0
      %p145 = por %p143, %p144
      %p146 = scmp.ne.s32.totalorder %s138, %s140
      %p147 = scmp.eq.s32.totalorder %s25, 1
      %p148 = por %p146, %p147
      %p149 = scmp.ne.s32.totalorder %s140, %s141
      %p150 = scmp.eq.s32.totalorder %s25, 0
      %p151 = por %p149, %p150
      %p152 = scmp.ne.s32.totalorder %s140, %s141
      %p153 = scmp.eq.s32.totalorder %s26, 1
      %p154 = por %p152, %p153
      %p156 = scmp.ne.s32.totalorder %s141, %s155
      %p157 = scmp.eq.s32.totalorder %s26, 0
      %p158 = por %p156, %p157
      %s160 = sadd.s32 %s159, 1
      %p163 = scmp.eq.s32.totalorder %s20, 1
      %p164 = scmp.ne.s32.totalorder %s159, %s161
      %p165 = scmp.eq.s32.totalorder %s20, 0
      %p166 = por %p164, %p165
      %p167 = scmp.ne.s32.totalorder %s159, %s161
      %p168 = scmp.eq.s32.totalorder %s25, 1
      %p169 = por %p167, %p168
      %p170 = scmp.ne.s32.totalorder %s161, %s162
      %p171 = scmp.eq.s32.totalorder %s25, 0
      %p172 = por %p170, %p171
      %p173 = scmp.ne.s32.totalorder %s161, %s162
      %p174 = scmp.eq.s32.totalorder %s26, 1
      %p175 = por %p173, %p174
      %p177 = scmp.ne.s32.totalorder %s162, %s176
      %p178 = scmp.eq.s32.totalorder %s26, 0
      %p179 = por %p177, %p178
      %s180 = ssub.s32 %s20, %s27
      %p181 = scmp.eq.s32.totalorder %s180, 0
      %s183 = sadd.s32 %s182, 1
      %s184 = scalar_select %p181, %s182, %s183
      %p187 = pneg %p181
      %p188 = scmp.eq.s32.totalorder %s20, 1
      %p189 = por %p187, %p188
      %p190 = scmp.ne.s32.totalorder %s182, %s185
      %p191 = scmp.eq.s32.totalorder %s20, 0
      %p192 = por %p190, %p191
      %p193 = scmp.ne.s32.totalorder %s182, %s185
      %p194 = scmp.eq.s32.totalorder %s25, 1
      %p195 = por %p193, %p194
      %p196 = scmp.ne.s32.totalorder %s185, %s186
      %p197 = scmp.eq.s32.totalorder %s25, 0
      %p198 = por %p196, %p197
      %p199 = scmp.ne.s32.totalorder %s185, %s186
      %p200 = scmp.eq.s32.totalorder %s26, 1
      %p201 = por %p199, %p200
      %p203 = scmp.ne.s32.totalorder %s186, %s202
      %p204 = scmp.eq.s32.totalorder %s26, 0
      %p205 = por %p203, %p204
      %p206 = scmp.le.s32.totalorder 1, %s20
      %p207 = scmp.lt.s32.totalorder %s20, 3
      %p208 = pnand %p206, %p207
      %p209 = pneg %p208
      // Predicated region
      $region9: #{tpu_custom_call.1} parent=5 // pred_check
        _
      $region10: #{tpu_custom_call.1} parent=5 // pred_check_branch
        %211 = sbr.rel (%p208) target = $region12
      $region11: #{tpu_custom_call.1} parent=5 // pred_region
        %s212 = ssub.s32 %s20, 1
        // Predicated region
        $region13: #{tpu_custom_call.1} parent=11 // pred_check
          %p213 = pneg %p67
        $region14: #{tpu_custom_call.1} parent=11 // pred_check_branch
          %215 = sbr.rel (%p213) target = $region16
        $region15: #{tpu_custom_call.1} parent=11 // pred_region
          %217 = vsyncadd [#allocation6], 0
          %s218 = sshll.u32 %s1, 4
          %s219 = int_to_ptr.hbm [resolvable:$true] %s218
          %s220 = sshll.u32 [#allocation5], 4
          %s221 = int_to_ptr.vmem [resolvable:$true] %s220
          %226 = dma.hbm_to_vmem [thread:$0]  %s219, 512, %s221, [#allocation6], 128, 128, 8
        $region16: #{tpu_custom_call.1} parent=11 // pred_fallthru
          _
        // Predicated region
        $region17: #{tpu_custom_call.1} parent=11 // pred_check
          %p227 = pneg %p88
        $region18: #{tpu_custom_call.1} parent=11 // pred_check_branch
          %229 = sbr.rel (%p227) target = $region20
        $region19: #{tpu_custom_call.1} parent=11 // pred_region
          _
        $region20: #{tpu_custom_call.1} parent=11 // pred_fallthru
          _
        // Predicated region
        $region21: #{tpu_custom_call.1} parent=11 // pred_check
          %p230 = pneg %p109
        $region22: #{tpu_custom_call.1} parent=11 // pred_check_branch
          %232 = sbr.rel (%p230) target = $region24
        $region23: #{tpu_custom_call.1} parent=11 // pred_region
          _
        $region24: #{tpu_custom_call.1} parent=11 // pred_fallthru
          _
        // Predicated region
        $region25: #{tpu_custom_call.1} parent=11 // pred_check
          %p233 = pneg %p130
        $region26: #{tpu_custom_call.1} parent=11 // pred_check_branch
          %235 = sbr.rel (%p233) target = $region28
        $region27: #{tpu_custom_call.1} parent=11 // pred_region
          _
        $region28: #{tpu_custom_call.1} parent=11 // pred_fallthru
          _
        // Predicated region
        $region29: #{tpu_custom_call.1} parent=11 // pred_check
          %p236 = pneg %p151
        $region30: #{tpu_custom_call.1} parent=11 // pred_check_branch
          %238 = sbr.rel (%p236) target = $region32
        $region31: #{tpu_custom_call.1} parent=11 // pred_region
          %240 = vsyncadd [#allocation6], 0
          %s241 = sshll.u32 %s5, 4
          %s242 = int_to_ptr.hbm [resolvable:$true] %s241
          %s243 = sshll.u32 [#allocation7], 4
          %s244 = int_to_ptr.vmem [resolvable:$true] %s243
          %249 = dma.hbm_to_vmem [thread:$0]  %s242, 2048, %s244, [#allocation6], 128, 128, 8
        $region32: #{tpu_custom_call.1} parent=11 // pred_fallthru
          _
        // Predicated region
        $region33: #{tpu_custom_call.1} parent=11 // pred_check
          %p250 = pneg %p172
        $region34: #{tpu_custom_call.1} parent=11 // pred_check_branch
          %252 = sbr.rel (%p250) target = $region36
        $region35: #{tpu_custom_call.1} parent=11 // pred_region
          _
        $region36: #{tpu_custom_call.1} parent=11 // pred_fallthru
          _
      $region12: #{tpu_custom_call.1} parent=5 // pred_fallthru
        _
      %p253 = scmp.lt.s32.totalorder %s20, 2
      // Predicated region
      $region37: #{tpu_custom_call.1} parent=5 // pred_check
        %p254 = pneg %p253
      $region38: #{tpu_custom_call.1} parent=5 // pred_check_branch
        %256 = sbr.rel (%p254) target = $region40
      $region39: #{tpu_custom_call.1} parent=5 // pred_region
        // Predicated region
        $region41: #{tpu_custom_call.1} parent=39 // pred_check
          %p257 = pneg %p40
        $region42: #{tpu_custom_call.1} parent=39 // pred_check_branch
          %259 = sbr.rel (%p257) target = $region44
        $region43: #{tpu_custom_call.1} parent=39 // pred_region
          %s260 = sand.u32 %s30, 1
          %s261 = scalar_lea.sflag [#allocation3], %s260
          %s262 = sand.u32 %s30, 1
          %s263 = smul.addr %s262, 8
          %s264 = scalar_lea.vmem [#allocation2], %s263
          %266 = vsyncadd %s261, 0
          %s267 = smul.addr %s20, 8
          %s268 = scalar_lea.hbm %s0, %s267
          %s270 = sshll.u32 %s268, 4
          %s271 = int_to_ptr.hbm [resolvable:$true] %s270
          %s272 = sshll.u32 %s264, 4
          %s273 = int_to_ptr.vmem [resolvable:$true] %s272
          %275 = dma.hbm_to_vmem [thread:$0]  %s271, 128, %s273, %s261
        $region44: #{tpu_custom_call.1} parent=39 // pred_fallthru
          _
      $region40: #{tpu_custom_call.1} parent=5 // pred_fallthru
        _
      %p276 = scmp.le.s32.totalorder 1, %s20
      %p277 = scmp.lt.s32.totalorder %s20, 3
      %p278 = pnand %p276, %p277
      %p279 = pneg %p278
      // Predicated region
      $region45: #{tpu_custom_call.1} parent=5 // pred_check
        _
      $region46: #{tpu_custom_call.1} parent=5 // pred_check_branch
        %281 = sbr.rel (%p278) target = $region48
      $region47: #{tpu_custom_call.1} parent=5 // pred_region
        %s282 = ssub.s32 %s20, 1
        %s283 = sand.u32 %s33, 1
        %s284 = scalar_lea.sflag [#allocation3], %s283
        %s285 = sand.u32 %s33, 1
        %s286 = smul.addr %s285, 8
        %s287 = scalar_lea.vmem [#allocation2], %s286
        // Predicated region
        $region49: #{tpu_custom_call.1} parent=47 // pred_check
          %p288 = pneg %p46
        $region50: #{tpu_custom_call.1} parent=47 // pred_check_branch
          %290 = sbr.rel (%p288) target = $region52
        $region51: #{tpu_custom_call.1} parent=47 // pred_region
          %292 = dma.done %s284, 128
        $region52: #{tpu_custom_call.1} parent=47 // pred_fallthru
          _
        // Predicated region
        $region53: #{tpu_custom_call.1} parent=47 // pred_check
          %p293 = pneg %p67
        $region54: #{tpu_custom_call.1} parent=47 // pred_check_branch
          %295 = sbr.rel (%p293) target = $region56
        $region55: #{tpu_custom_call.1} parent=47 // pred_region
          %297 = dma.done [#allocation6], 512
        $region56: #{tpu_custom_call.1} parent=47 // pred_fallthru
          _
        // Predicated region
        $region57: #{tpu_custom_call.1} parent=47 // pred_check
          %p298 = pneg %p151
        $region58: #{tpu_custom_call.1} parent=47 // pred_check_branch
          %300 = sbr.rel (%p298) target = $region60
        $region59: #{tpu_custom_call.1} parent=47 // pred_region
          %302 = dma.done [#allocation6], 2048
        $region60: #{tpu_custom_call.1} parent=47 // pred_fallthru
          _
        %s303 = sand.u32 %s33, 1
        %s304 = scalar_lea.sflag [#allocation3], %s303
        %s305 = sand.u32 %s33, 1
        %s306 = smul.addr %s305, 8
        %s307 = scalar_lea.vmem [#allocation2], %s306
        %p308 = pneg %p46
        %p309 = pneg %p43
        %p310 = pneg %p67
        %p311 = pneg %p64
        %p312 = pneg %p88
        %p313 = pneg %p85
        %p314 = pneg %p109
        %p315 = pneg %p106
        %p316 = pneg %p130
        %p317 = pneg %p127
        %p318 = pneg %p151
        %p319 = pneg %p148
        %p320 = pneg %p172
        %p321 = pneg %p169
        %p322 = pneg %p198
        %p323 = pneg %p195
        %s324 = sand.u32 %s185, 1
        %s325 = scalar_lea.sflag [#allocation4], %s324
        %s326 = sand.u32 %s185, 1
        %s327 = smul.addr %s326, 8
        %s328 = scalar_lea.vmem [#allocation8], %s327
        %v329 = vld [vmem:[%s287] sm:$0xff]
        %v330 = vld [vmem:[#allocation5] sm:$0xff]
        %v331 = vld [vmem:[#allocation5 + $0x8] sm:$0xff]
        %v332 = vld [vmem:[#allocation5 + $0x10] sm:$0xff]
        %v333 = vld [vmem:[#allocation5 + $0x18] sm:$0xff]
        %v334 = vld [vmem:[%s2] sm:$0x1]
        %v336 = vperm.slane %v334, 0
        %vm338 = vcmask 261120
        %v340 = vsel %vm338, %v329, 0
        %342 = vmatpush.msra.mxu0 0.0
        %343 = vmatpush.msra.mxu0 0.0
        %344 = vmatpush.msra.mxu0 0.0
        %345 = vmatpush.msra.mxu0 0.0
        %346 = vmatpush.msra.mxu0 0.0
        %347 = vmatpush.msra.mxu0 0.0
        %348 = vmatpush.msra.mxu0 0.0
        %349 = vmatpush.msra.mxu0 0.0
        %350 = vmatpush.msra.mxu0 0.0
        %351 = vmatpush.msra.mxu0 0.0
        %352 = vmatpush.msra.mxu0 0.0
        %353 = vmatpush.msra.mxu0 0.0
        %354 = vmatpush.msra.mxu0 %v333
        %355 = vmatpush.msra.mxu0 %v332
        %356 = vmatpush.msra.mxu0 %v331
        %357 = vmatpush.msra.mxu0 %v330
        %358 = vmatmul.f32.gmra.mxu0 %v340
        %v359 = vpop.f32.mrf.mxu0
        %v360 = vadd.f32 %v336, %v359
        %361 = vdwg.mxu0
        %362 = vadd.xlane.f32.xlu0 %v360
        %v363 = vpop.xlane.xlu0 %362
        %v364 = vmul.f32 %v363, 0.03125
        %v365 = vmul.f32 %v360, %v360
        %366 = vadd.xlane.f32.xlu0 %v365
        %v367 = vpop.xlane.xlu0 %366
        %v368 = vmul.f32 %v367, 0.03125
        %v369 = vmul.f32 %v364, %v364
        %v370 = vsub.f32 %v368, %v369
        %v371 = vmax.f32 %v370, 0.0
        %v372 = vsub.f32 %v360, %v364
        %v373 = vadd.f32 %v371, 1e-05
        %v374 = vrsqrt.pop %v373
        %v375 = vmul.f32 %v374, %v373
        %v376 = vmul.f32 %v375, %v374
        %v377 = vmul.f32 0.5, %v376
        %v378 = vsub.f32 1.5, %v377
        %v379 = vmul.f32 %v374, %v378
        %vm380 = vweird.f32 %v373
        %vm381 = vweird.f32 %v374
        %vm382 = vmor %vm380, %vm381
        %v383 = vsel %vm382, %v374, %v379
        %v384 = vmul.f32 %v372, %v383
        %v385 = vld [vmem:[%s3] sm:$0x1]
        %v387 = vperm.slane %v385, 0
        %v389 = vmul.f32 %v384, %v387
        %v390 = vld [vmem:[%s4] sm:$0x1]
        %v392 = vperm.slane %v390, 0
        %v394 = vadd.f32 %v389, %v392
        %v395 = vmul.f32 %v394, 0.5
        %v396 = vmul.f32 %v394, 0.70710677
        %v397 = vmul.f32 %v396, %v396
        %v398 = vmin.f32 16.0, %v397
        %v399 = vmul.f32 %v398, 2.1237322e-06
        %v400 = vadd.f32 %v399, 0.00028619796
        %v401 = vmul.f32 %v398, %v400
        %v402 = vadd.f32 %v401, 0.0036580483
        %v403 = vmul.f32 %v398, %v402
        %v404 = vadd.f32 %v403, 0.05243302
        %v405 = vmul.f32 %v398, %v404
        %v406 = vadd.f32 %v405, 0.18741608
        %v407 = vmul.f32 %v398, %v406
        %v408 = vadd.f32 %v407, 1.1283791
        %v409 = vmul.f32 %v396, %v408
        %v410 = vmul.f32 %v398, 3.8918573e-05
        %v411 = vadd.f32 %v410, 0.001143296
        %v412 = vmul.f32 %v398, %v411
        %v413 = vadd.f32 %v412, 0.014752088
        %v414 = vmul.f32 %v398, %v413
        %v415 = vadd.f32 %v414, 0.112945676
        %v416 = vmul.f32 %v398, %v415
        %v417 = vadd.f32 %v416, 0.4994258
        %v418 = vmul.f32 %v398, %v417
        %v419 = vadd.f32 %v418, 1.0
        %v420 = vrcp.pop %v419
        %v421 = vmul.f32 %v419, %v420
        %v422 = vsub.f32 1.0, %v421
        %v423 = vmul.f32 %v420, %v422
        %v424 = vadd.f32 %v420, %v423
        %vm425 = vweird.f32 %v419
        %vm426 = vweird.f32 %v420
        %vm427 = vmor %vm425, %vm426
        %v428 = vsel %vm427, %v420, %v424
        %v429 = vand.u32 2147483647, %v419
        %vm430 = vcmp.eq.f32.partialorder %v429, 8.507059e+37
        %v431 = vand.u32 %v419, 2147483648
        %v432 = vor.u32 1.1754944e-38, %v431
        %v433 = vsel %vm430, %v432, %v428
        %v434 = vmul.f32 %v409, %v433
        %v435 = vmin.f32 %v434, 1.0
        %v436 = vmax.f32 %v435, -1.0
        %v437 = vadd.f32 %v436, 1.0
        %v438 = vmul.f32 %v395, %v437
        %v439 = vld [vmem:[#allocation7] sm:$0xff]
        %v440 = vld [vmem:[#allocation7 + $0x8] sm:$0xff]
        %v441 = vld [vmem:[#allocation7 + $0x10] sm:$0xff]
        %v442 = vld [vmem:[#allocation7 + $0x18] sm:$0xff]
        %v443 = vld [vmem:[#allocation7 + $0x20] sm:$0xff]
        %v444 = vld [vmem:[#allocation7 + $0x28] sm:$0xff]
        %v445 = vld [vmem:[#allocation7 + $0x30] sm:$0xff]
        %v446 = vld [vmem:[#allocation7 + $0x38] sm:$0xff]
        %v447 = vld [vmem:[#allocation7 + $0x40] sm:$0xff]
        %v448 = vld [vmem:[#allocation7 + $0x48] sm:$0xff]
        %v449 = vld [vmem:[#allocation7 + $0x50] sm:$0xff]
        %v450 = vld [vmem:[#allocation7 + $0x58] sm:$0xff]
        %v451 = vld [vmem:[#allocation7 + $0x60] sm:$0xff]
        %v452 = vld [vmem:[#allocation7 + $0x68] sm:$0xff]
        %v453 = vld [vmem:[#allocation7 + $0x70] sm:$0xff]
        %v454 = vld [vmem:[#allocation7 + $0x78] sm:$0xff]
        %v455 = vld [vmem:[%s6] sm:$0x1]
        %v457 = vperm.slane %v455, 0
        %459 = vmatpush.msra.mxu0 %v454
        %460 = vmatpush.msra.mxu0 %v453
        %461 = vmatpush.msra.mxu0 %v452
        %462 = vmatpush.msra.mxu0 %v451
        %463 = vmatpush.msra.mxu0 %v450
        %464 = vmatpush.msra.mxu0 %v449
        %465 = vmatpush.msra.mxu0 %v448
        %466 = vmatpush.msra.mxu0 %v447
        %467 = vmatpush.msra.mxu0 %v446
        %468 = vmatpush.msra.mxu0 %v445
        %469 = vmatpush.msra.mxu0 %v444
        %470 = vmatpush.msra.mxu0 %v443
        %471 = vmatpush.msra.mxu0 %v442
        %472 = vmatpush.msra.mxu0 %v441
        %473 = vmatpush.msra.mxu0 %v440
        %474 = vmatpush.msra.mxu0 %v439
        %475 = vmatmul.f32.gmra.mxu0 %v438
        %v476 = vpop.f32.mrf.mxu0
        %v477 = vadd.f32 %v457, %v476
        %478 = vdwg.mxu0
        %479 = vst [vmem:[%s328] sm:$0xff] %v477
        %s480 = sand.u32 %s185, 1
        %s481 = scalar_lea.sflag [#allocation4], %s480
        %s482 = sand.u32 %s185, 1
        %s483 = smul.addr %s482, 8
        %s484 = scalar_lea.vmem [#allocation8], %s483
        // Predicated region
        $region61: #{tpu_custom_call.1} parent=47 // pred_check
          %p485 = pneg %p195
        $region62: #{tpu_custom_call.1} parent=47 // pred_check_branch
          %487 = sbr.rel (%p485) target = $region64
        $region63: #{tpu_custom_call.1} parent=47 // pred_region
          %489 = vsyncadd %s481, 0
          %s490 = smul.addr %s25, 8
          %s491 = scalar_lea.hbm %s7, %s490
          %s493 = sshll.u32 %s484, 4
          %s494 = int_to_ptr.vmem [resolvable:$true] %s493
          %s495 = sshll.u32 %s491, 4
          %s496 = int_to_ptr.hbm [resolvable:$true] %s495
          %498 = dma.vmem_to_hbm [thread:$0]  %s494, 128, %s496, %s481
        $region64: #{tpu_custom_call.1} parent=47 // pred_fallthru
          _
      $region48: #{tpu_custom_call.1} parent=5 // pred_fallthru
        _
      %p499 = scmp.le.s32.totalorder 2, %s20
      // Predicated region
      $region65: #{tpu_custom_call.1} parent=5 // pred_check
        %p500 = pneg %p499
      $region66: #{tpu_custom_call.1} parent=5 // pred_check_branch
        %502 = sbr.rel (%p500) target = $region68
      $region67: #{tpu_custom_call.1} parent=5 // pred_region
        %s503 = ssub.s32 %s20, 2
        // Predicated region
        $region69: #{tpu_custom_call.1} parent=67 // pred_check
          %p504 = pneg %p201
        $region70: #{tpu_custom_call.1} parent=67 // pred_check_branch
          %506 = sbr.rel (%p504) target = $region72
        $region71: #{tpu_custom_call.1} parent=67 // pred_region
          %s507 = sand.u32 %s186, 1
          %s508 = scalar_lea.sflag [#allocation4], %s507
          %s509 = sand.u32 %s186, 1
          %s510 = smul.addr %s509, 8
          %s511 = scalar_lea.vmem [#allocation8], %s510
          %513 = dma.done %s508, 128
        $region72: #{tpu_custom_call.1} parent=67 // pred_fallthru
          _
      $region68: #{tpu_custom_call.1} parent=5 // pred_fallthru
        _
    $region6: #{tpu_custom_call.1} parent=1 // loop_footer
      %s24 = sadd.s32 1, %s20
    $region7: #{tpu_custom_call.1} parent=1 // loop_footer_branch
      %19 = sbr.rel target = $region3
    $region8: #{tpu_custom_call.1} parent=1 // loop_exit
      _
    %514 = vsyncpa [#allocation3], 1
    %s515 = scalar_lea.sflag [#allocation3], 1
    %516 = vsyncpa %s515, 1
    %517 = vsyncpa [#allocation6], 1
    %518 = vsyncpa [#allocation4], 1
    %s519 = scalar_lea.sflag [#allocation4], 1
    %520 = vsyncpa %s519, 1

</llo_original>
